<compile_context>
chip_gen: v7x
topology: tpu7x:2x2x1
jax: 0.10.0
libtpu: 0.0.40
codegen_flags: <defaults>
</compile_context>

<pallas_src>
import jax
import jax.numpy as jnp
from jax.experimental import pallas as pl
from jax.experimental.pallas import tpu as pltpu

LANE = 128
MAX_TILE_B = 1024  # per-step VMEM ~ (4+3)*1024*4B << scoped limit on v5e/v6e/v7x


def _round_up(a, m):
    return (a + m - 1) // m * m


def mlp_kernel(xt_ref, w1t_ref, b1_ref, w2t_ref, b2_ref, ot_ref):
    xt = xt_ref[...]                                                   # (4, TILE_B)
    h = jnp.dot(w1t_ref[...], xt, preferred_element_type=jnp.float32) + b1_ref[...]
    h = jnp.maximum(h, 0.0)                                            # ReLU, (8, TILE_B)
    y = jnp.dot(w2t_ref[...], h, preferred_element_type=jnp.float32) + b2_ref[...]
    # Numerically-stable sigmoid; exp and reciprocal both route to the EUP slot.
    e = jnp.exp(-jnp.abs(y))
    inv = pl.reciprocal(1.0 + e)
    ot_ref[...] = jnp.where(y >= 0.0, inv, e * inv)                    # (3, TILE_B)


def mlp_forward(x, w1, b1, w2, b2):
    """x: (B, 4); w1: (4, 8); b1: (8,); w2: (8, 3); b2: (3,).  Returns (B, 3)."""
    B, d_in = x.shape
    d_hid = w1.shape[1]
    d_out = w2.shape[1]

    tile_b = min(MAX_TILE_B, _round_up(B, LANE))
    b_pad = _round_up(B, tile_b)
    grid = (b_pad // tile_b,)

    # Wrapper-side layout plumbing: batch-on-lanes transpose + pad (pure XLA, cheap).
    xt = jnp.pad(x, ((0, b_pad - B), (0, 0))).T        # (4, b_pad)
    w1t = w1.T                                         # (8, 4)
    w2t = w2.T                                         # (3, 8)
    b1c = b1.reshape(d_hid, 1)                         # (8, 1) column, lane-broadcast
    b2c = b2.reshape(d_out, 1)                         # (3, 1)

    out_t = pl.pallas_call(
        mlp_kernel,
        out_shape=jax.ShapeDtypeStruct((d_out, b_pad), jnp.float32),
        grid=grid,
        in_specs=[
            pl.BlockSpec((d_in, tile_b), lambda i: (0, i)),   # x^T tile, batch on lanes
            pl.BlockSpec((d_hid, d_in), lambda i: (0, 0)),    # weights: constant maps,
            pl.BlockSpec((d_hid, 1), lambda i: (0, 0)),       # stay VMEM-resident
            pl.BlockSpec((d_out, d_hid), lambda i: (0, 0)),
            pl.BlockSpec((d_out, 1), lambda i: (0, 0)),
        ],
        out_specs=pl.BlockSpec((d_out, tile_b), lambda i: (0, i)),
        compiler_params=pltpu.CompilerParams(dimension_semantics=("parallel",)),
    )(xt, w1t, b1c, w2t, b2c)

    return out_t[:, :B].T                              # back to (B, 3)


def reference_forward(x, w1, b1, w2, b2):
    h = jnp.maximum(x @ w1 + b1, 0.0)
    return jax.nn.sigmoid(h @ w2 + b2)


if __name__ == "__main__":
    key = jax.random.PRNGKey(0)
    k_x, k_w1, k_b1, k_w2, k_b2 = jax.random.split(key, 5)

    B, D_IN, D_HID, D_OUT = 8, 4, 8, 3

    x = jax.random.normal(k_x, (B, D_IN), dtype=jnp.float32)

    # Deterministic init mimicking nn.Linear's U(-1/sqrt(fan_in), 1/sqrt(fan_in)).
    lim1 = 1.0 / (D_IN ** 0.5)
    w1 = jax.random.uniform(k_w1, (D_IN, D_HID), jnp.float32, -lim1, lim1)
    b1 = jax.random.uniform(k_b1, (D_HID,), jnp.float32, -lim1, lim1)
    lim2 = 1.0 / (D_HID ** 0.5)
    w2 = jax.random.uniform(k_w2, (D_HID, D_OUT), jnp.float32, -lim2, lim2)
    b2 = jax.random.uniform(k_b2, (D_OUT,), jnp.float32, -lim2, lim2)

    out = mlp_forward(x, w1, b1, w2, b2)
    jax.block_until_ready(out)

    ref = reference_forward(x, w1, b1, w2, b2)
    assert out.shape == (B, D_OUT)
    assert jnp.allclose(out, ref, atol=1e-5, rtol=1e-5)

    print("KERNEL_OK")
</pallas_src>

<mosaic_0001>
module attributes {stable_mosaic.version = 11 : i64} {
  func.func @mlp_kernel(%arg0: i32, %arg1: memref<4x128xf32, #tpu.memory_space<vmem>>, %arg2: memref<8x4xf32, #tpu.memory_space<vmem>>, %arg3: memref<8x1xf32, #tpu.memory_space<vmem>>, %arg4: memref<3x8xf32, #tpu.memory_space<vmem>>, %arg5: memref<3x1xf32, #tpu.memory_space<vmem>>, %arg6: memref<3x128xf32, #tpu.memory_space<vmem>>) attributes {dimension_semantics = [#tpu.dimension_semantics<parallel>], iteration_bounds = array<i64: 1>, scalar_prefetch = 0 : i64, scratch_operands = 0 : i64, tpu.core_type = #tpu.core_type<tc>, window_params = [{transform_indices = @transform_0, window_bounds = array<i64: 4, 128>}, {pipeline_mode = #tpu.pipeline_mode<synchronous>, transform_indices = @transform_1, window_bounds = array<i64: 8, 4>}, {pipeline_mode = #tpu.pipeline_mode<synchronous>, transform_indices = @transform_2, window_bounds = array<i64: 8, 1>}, {pipeline_mode = #tpu.pipeline_mode<synchronous>, transform_indices = @transform_3, window_bounds = array<i64: 3, 8>}, {pipeline_mode = #tpu.pipeline_mode<synchronous>, transform_indices = @transform_4, window_bounds = array<i64: 3, 1>}, {transform_indices = @transform_5, window_bounds = array<i64: 3, 128>}]} {
    %c0 = arith.constant 0 : index
    %c0_0 = arith.constant 0 : index
    %0 = vector.load %arg1[%c0, %c0_0] : memref<4x128xf32, #tpu.memory_space<vmem>>, vector<4x128xf32>
    %c0_1 = arith.constant 0 : index
    %c0_2 = arith.constant 0 : index
    %1 = vector.load %arg2[%c0_1, %c0_2] : memref<8x4xf32, #tpu.memory_space<vmem>>, vector<8x4xf32>
    %cst = arith.constant dense<0.000000e+00> : vector<8x128xf32>
    %2 = tpu.matmul %1, %0, %cst {dimension_numbers = #tpu.dot_dimension_numbers<[1], [0], [0], [1], [0, 0, 1, 1], [], []>} : vector<8x4xf32>, vector<4x128xf32>, vector<8x128xf32> -> vector<8x128xf32>
    %c0_3 = arith.constant 0 : index
    %c0_4 = arith.constant 0 : index
    %3 = vector.load %arg3[%c0_3, %c0_4] : memref<8x1xf32, #tpu.memory_space<vmem>>, vector<8x1xf32>
    %4 = vector.broadcast %3 : vector<8x1xf32> to vector<8x128xf32>
    %5 = arith.addf %2, %4 : vector<8x128xf32>
    %cst_5 = arith.constant 0.000000e+00 : f32
    %6 = vector.broadcast %cst_5 : f32 to vector<8x128xf32>
    %7 = arith.maximumf %5, %6 : vector<8x128xf32>
    %c0_6 = arith.constant 0 : index
    %c0_7 = arith.constant 0 : index
    %8 = vector.load %arg4[%c0_6, %c0_7] : memref<3x8xf32, #tpu.memory_space<vmem>>, vector<3x8xf32>
    %cst_8 = arith.constant dense<0.000000e+00> : vector<3x128xf32>
    %9 = tpu.matmul %8, %7, %cst_8 {dimension_numbers = #tpu.dot_dimension_numbers<[1], [0], [0], [1], [0, 0, 1, 1], [], []>} : vector<3x8xf32>, vector<8x128xf32>, vector<3x128xf32> -> vector<3x128xf32>
    %c0_9 = arith.constant 0 : index
    %c0_10 = arith.constant 0 : index
    %10 = vector.load %arg5[%c0_9, %c0_10] : memref<3x1xf32, #tpu.memory_space<vmem>>, vector<3x1xf32>
    %11 = vector.broadcast %10 : vector<3x1xf32> to vector<3x128xf32>
    %12 = arith.addf %9, %11 : vector<3x128xf32>
    %13 = math.absf %12 : vector<3x128xf32>
    %cst_11 = arith.constant 0.000000e+00 : f32
    %14 = vector.broadcast %cst_11 : f32 to vector<3x128xf32>
    %15 = arith.subf %14, %13 : vector<3x128xf32>
    %16 = math.exp %15 : vector<3x128xf32>
    %cst_12 = arith.constant 1.000000e+00 : f32
    %17 = vector.broadcast %cst_12 : f32 to vector<3x128xf32>
    %18 = arith.addf %17, %16 : vector<3x128xf32>
    %19 = tpu.reciprocal %18 : vector<3x128xf32> -> vector<3x128xf32>
    %cst_13 = arith.constant 0.000000e+00 : f32
    %20 = vector.broadcast %cst_13 : f32 to vector<3x128xf32>
    %21 = arith.cmpf oge, %12, %20 : vector<3x128xf32>
    %22 = arith.mulf %16, %19 : vector<3x128xf32>
    %23 = arith.select %21, %19, %22 : vector<3x128xi1>, vector<3x128xf32>
    %c0_14 = arith.constant 0 : index
    %c0_15 = arith.constant 0 : index
    %24 = vector.load %arg6[%c0_14, %c0_15] : memref<3x128xf32, #tpu.memory_space<vmem>>, vector<3x128xf32>
    tpu.vector_store %arg6[%c0_14, %c0_15], %23 {strides = array<i32>} : memref<3x128xf32, #tpu.memory_space<vmem>>, vector<3x128xf32>,
    return
  }
  func.func @transform_0(%arg0: i32) -> (i32, i32) {
    %c0_i32 = arith.constant 0 : i32
    %c0_i32_0 = arith.constant 0 : i32
    return %c0_i32, %arg0 : i32, i32
  }
  func.func @transform_1(%arg0: i32) -> (i32, i32) {
    %c0_i32 = arith.constant 0 : i32
    %c0_i32_0 = arith.constant 0 : i32
    %c0_i32_1 = arith.constant 0 : i32
    return %c0_i32, %c0_i32_0 : i32, i32
  }
  func.func @transform_2(%arg0: i32) -> (i32, i32) {
    %c0_i32 = arith.constant 0 : i32
    %c0_i32_0 = arith.constant 0 : i32
    %c0_i32_1 = arith.constant 0 : i32
    return %c0_i32, %c0_i32_0 : i32, i32
  }
  func.func @transform_3(%arg0: i32) -> (i32, i32) {
    %c0_i32 = arith.constant 0 : i32
    %c0_i32_0 = arith.constant 0 : i32
    %c0_i32_1 = arith.constant 0 : i32
    return %c0_i32, %c0_i32_0 : i32, i32
  }
  func.func @transform_4(%arg0: i32) -> (i32, i32) {
    %c0_i32 = arith.constant 0 : i32
    %c0_i32_0 = arith.constant 0 : i32
    %c0_i32_1 = arith.constant 0 : i32
    return %c0_i32, %c0_i32_0 : i32, i32
  }
  func.func @transform_5(%arg0: i32) -> (i32, i32) {
    %c0_i32 = arith.constant 0 : i32
    %c0_i32_0 = arith.constant 0 : i32
    return %c0_i32, %arg0 : i32, i32
  }
}

</mosaic_0001>

<llo_original>
// kernel: tpu_custom_call.1
$region0: #{tpu_custom_call.1}
  #allocation0 [shape = 'u32[]', space=smem, size = 0x4, offset = 0x4, fixed_abs, tag = 'smem constant byte address 0x4 - core index']
  #allocation1 [shape = 'u32[144,128]{1,0:T(1,128)}', space=vmem, size = 0x12000, scoped, tag = 'internal scratch']
  %s0 = inlined_call_operand.vmem [shape: f32[4,128], index: 0, kind: input, shape index: {}]
  %s1 = inlined_call_operand.vmem [shape: f32[8,4], index: 1, kind: input, shape index: {}]
  %s2 = inlined_call_operand.vmem [shape: f32[8,1], index: 2, kind: input, shape index: {}]
  %s3 = inlined_call_operand.vmem [shape: f32[3,8], index: 3, kind: input, shape index: {}]
  %s4 = inlined_call_operand.vmem [shape: f32[3,1], index: 4, kind: input, shape index: {}]
  %s5 = inlined_call_operand.hbm [shape: f32[3,128], index: 5, kind: output, shape index: {}]
  %s6 = sld [smem:[#allocation0]]
  $region30: #{tpu_custom_call.1} parent=0
    _
  %s8 = ssub.s32 1, %s6
  %s9 = scalar_select 0, %s8, %s6
  $region1: #{tpu_custom_call.1} parent=0
    #allocation2 [shape = 'u8[2048]{0}', space=vmem, size = 0x800, scoped, tag = 'output window, operand 0, single buffered']
    #allocation3 [shape = 's32[1]{0}', space=sflag, size = 0x4, scoped, tag = 'scoped memory for tpu_custom_call.1']
    %10 = vsyncpa [#allocation3], 0
    // Predicated region
    $region2: #{tpu_custom_call.1} parent=1 // pred_check
      _
    $region3: #{tpu_custom_call.1} parent=1 // pred_check_branch
      %12 = sbr.rel (0) target = $region5
    $region4: #{tpu_custom_call.1} parent=1 // pred_region
      _
    $region5: #{tpu_custom_call.1} parent=1 // pred_fallthru
      _
    // Predicated region
    $region6: #{tpu_custom_call.1} parent=1 // pred_check
      _
    $region7: #{tpu_custom_call.1} parent=1 // pred_check_branch
      %14 = sbr.rel (0) target = $region9
    $region8: #{tpu_custom_call.1} parent=1 // pred_region
      _
    $region9: #{tpu_custom_call.1} parent=1 // pred_fallthru
      _
    // Predicated region
    $region10: #{tpu_custom_call.1} parent=1 // pred_check
      _
    $region11: #{tpu_custom_call.1} parent=1 // pred_check_branch
      %16 = sbr.rel (0) target = $region13
    $region12: #{tpu_custom_call.1} parent=1 // pred_region
      _
    $region13: #{tpu_custom_call.1} parent=1 // pred_fallthru
      _
    // Predicated region
    $region14: #{tpu_custom_call.1} parent=1 // pred_check
      _
    $region15: #{tpu_custom_call.1} parent=1 // pred_check_branch
      %18 = sbr.rel (0) target = $region17
    $region16: #{tpu_custom_call.1} parent=1 // pred_region
      _
    $region17: #{tpu_custom_call.1} parent=1 // pred_fallthru
      _
    // Predicated region
    $region18: #{tpu_custom_call.1} parent=1 // pred_check
      _
    $region19: #{tpu_custom_call.1} parent=1 // pred_check_branch
      %20 = sbr.rel (0) target = $region21
    $region20: #{tpu_custom_call.1} parent=1 // pred_region
      _
    $region21: #{tpu_custom_call.1} parent=1 // pred_fallthru
      _
    %v21 = vld [vmem:[%s0] sm:$0xf]
    %v22 = vld [vmem:[%s1] sm:$0xff]
    %v23 = vld [vmem:[%s2] sm:$0xff]
    %25 = vset.pattern.permute.xlu0 0
    %26 = vperm.xlu0 %25, %v23
    %v27 = vpop.permute.xlu0 %26
    %vm29 = vcmask 31744
    %v31 = vsel %vm29, %v22, 0
    %vm33 = vcmask 1043456
    %v35 = vsel %vm33, %v21, 0
    %37 = vmatprep.subr.mxu0 0.0
    %38 = vmatpush1.msra.mxu0 %v35
    %39 = vmatprep.subr.mxu0 0.0
    %40 = vmatpush1.msra.mxu0 0.0
    %41 = vmatprep.subr.mxu0 0.0
    %42 = vmatpush1.msra.mxu0 0.0
    %43 = vmatprep.subr.mxu0 0.0
    %44 = vmatpush1.msra.mxu0 0.0
    %45 = vmatprep.subr.mxu0 0.0
    %46 = vmatpush1.msra.mxu0 0.0
    %47 = vmatprep.subr.mxu0 0.0
    %48 = vmatpush1.msra.mxu0 0.0
    %49 = vmatprep.subr.mxu0 0.0
    %50 = vmatpush1.msra.mxu0 0.0
    %51 = vmatprep.subr.mxu0 0.0
    %52 = vmatpush1.msra.mxu0 0.0
    %53 = vmatprep.subr.mxu0 0.0
    %54 = vmatpush1.msra.mxu0 0.0
    %55 = vmatprep.subr.mxu0 0.0
    %56 = vmatpush1.msra.mxu0 0.0
    %57 = vmatprep.subr.mxu0 0.0
    %58 = vmatpush1.msra.mxu0 0.0
    %59 = vmatprep.subr.mxu0 0.0
    %60 = vmatpush1.msra.mxu0 0.0
    %61 = vmatprep.subr.mxu0 0.0
    %62 = vmatpush1.msra.mxu0 0.0
    %63 = vmatprep.subr.mxu0 0.0
    %64 = vmatpush1.msra.mxu0 0.0
    %65 = vmatprep.subr.mxu0 0.0
    %66 = vmatpush1.msra.mxu0 0.0
    %67 = vmatprep.subr.mxu0 0.0
    %68 = vmatpush1.msra.mxu0 0.0
    %69 = vmatprep.subr.mxu0 0.0
    %70 = vmatpush1.msra.mxu0 0.0
    %71 = vmatprep.subr.mxu0 0.0
    %72 = vmatpush1.msra.mxu0 0.0
    %73 = vmatprep.subr.mxu0 0.0
    %74 = vmatpush1.msra.mxu0 0.0
    %75 = vmatprep.subr.mxu0 0.0
    %76 = vmatpush1.msra.mxu0 0.0
    %77 = vmatprep.subr.mxu0 0.0
    %78 = vmatpush1.msra.mxu0 0.0
    %79 = vmatprep.subr.mxu0 0.0
    %80 = vmatpush1.msra.mxu0 0.0
    %81 = vmatprep.subr.mxu0 0.0
    %82 = vmatpush1.msra.mxu0 0.0
    %83 = vmatprep.subr.mxu0 0.0
    %84 = vmatpush1.msra.mxu0 0.0
    %85 = vmatprep.subr.mxu0 0.0
    %86 = vmatpush1.msra.mxu0 0.0
    %87 = vmatprep.subr.mxu0 0.0
    %88 = vmatpush1.msra.mxu0 0.0
    %89 = vmatprep.subr.mxu0 0.0
    %90 = vmatpush1.msra.mxu0 0.0
    %91 = vmatprep.subr.mxu0 0.0
    %92 = vmatpush1.msra.mxu0 0.0
    %93 = vmatprep.subr.mxu0 0.0
    %94 = vmatpush1.msra.mxu0 0.0
    %95 = vmatprep.subr.mxu0 0.0
    %96 = vmatpush1.msra.mxu0 0.0
    %97 = vmatprep.subr.mxu0 0.0
    %98 = vmatpush1.msra.mxu0 0.0
    %99 = vmatprep.subr.mxu0 0.0
    %100 = vmatpush1.msra.mxu0 0.0
    %101 = vmatprep.mubr.f32.mxu0 0.0
    %102 = vmatmul.mubr.f32.gmra.mrb[0].mxu0 %v31
    %v103 = vpop.f32.mrb[0].mxu0
    %v104 = vadd.f32 %v27, %v103
    %v105 = vpop.f32.mrb[0].mxu0
    %106 = vdwg.mxu0
    %v107 = vmax.f32 %v104, 0.0
    %v108 = vld [vmem:[%s3] sm:$0x7]
    %v109 = vld [vmem:[%s4] sm:$0x7]
    %111 = vset.pattern.permute.xlu0 0
    %112 = vperm.xlu0 %111, %v109
    %v113 = vpop.permute.xlu0 %112
    %vm115 = vcmask 64512
    %v117 = vsel %vm115, %v108, 0
    %119 = vmatprep.subr.mxu0 0.0
    %120 = vmatpush1.msra.mxu0 %v107
    %121 = vmatprep.subr.mxu0 0.0
    %122 = vmatpush1.msra.mxu0 0.0
    %123 = vmatprep.subr.mxu0 0.0
    %124 = vmatpush1.msra.mxu0 0.0
    %125 = vmatprep.subr.mxu0 0.0
    %126 = vmatpush1.msra.mxu0 0.0
    %127 = vmatprep.subr.mxu0 0.0
    %128 = vmatpush1.msra.mxu0 0.0
    %129 = vmatprep.subr.mxu0 0.0
    %130 = vmatpush1.msra.mxu0 0.0
    %131 = vmatprep.subr.mxu0 0.0
    %132 = vmatpush1.msra.mxu0 0.0
    %133 = vmatprep.subr.mxu0 0.0
    %134 = vmatpush1.msra.mxu0 0.0
    %135 = vmatprep.subr.mxu0 0.0
    %136 = vmatpush1.msra.mxu0 0.0
    %137 = vmatprep.subr.mxu0 0.0
    %138 = vmatpush1.msra.mxu0 0.0
    %139 = vmatprep.subr.mxu0 0.0
    %140 = vmatpush1.msra.mxu0 0.0
    %141 = vmatprep.subr.mxu0 0.0
    %142 = vmatpush1.msra.mxu0 0.0
    %143 = vmatprep.subr.mxu0 0.0
    %144 = vmatpush1.msra.mxu0 0.0
    %145 = vmatprep.subr.mxu0 0.0
    %146 = vmatpush1.msra.mxu0 0.0
    %147 = vmatprep.subr.mxu0 0.0
    %148 = vmatpush1.msra.mxu0 0.0
    %149 = vmatprep.subr.mxu0 0.0
    %150 = vmatpush1.msra.mxu0 0.0
    %151 = vmatprep.subr.mxu0 0.0
    %152 = vmatpush1.msra.mxu0 0.0
    %153 = vmatprep.subr.mxu0 0.0
    %154 = vmatpush1.msra.mxu0 0.0
    %155 = vmatprep.subr.mxu0 0.0
    %156 = vmatpush1.msra.mxu0 0.0
    %157 = vmatprep.subr.mxu0 0.0
    %158 = vmatpush1.msra.mxu0 0.0
    %159 = vmatprep.subr.mxu0 0.0
    %160 = vmatpush1.msra.mxu0 0.0
    %161 = vmatprep.subr.mxu0 0.0
    %162 = vmatpush1.msra.mxu0 0.0
    %163 = vmatprep.subr.mxu0 0.0
    %164 = vmatpush1.msra.mxu0 0.0
    %165 = vmatprep.subr.mxu0 0.0
    %166 = vmatpush1.msra.mxu0 0.0
    %167 = vmatprep.subr.mxu0 0.0
    %168 = vmatpush1.msra.mxu0 0.0
    %169 = vmatprep.subr.mxu0 0.0
    %170 = vmatpush1.msra.mxu0 0.0
    %171 = vmatprep.subr.mxu0 0.0
    %172 = vmatpush1.msra.mxu0 0.0
    %173 = vmatprep.subr.mxu0 0.0
    %174 = vmatpush1.msra.mxu0 0.0
    %175 = vmatprep.subr.mxu0 0.0
    %176 = vmatpush1.msra.mxu0 0.0
    %177 = vmatprep.subr.mxu0 0.0
    %178 = vmatpush1.msra.mxu0 0.0
    %179 = vmatprep.subr.mxu0 0.0
    %180 = vmatpush1.msra.mxu0 0.0
    %181 = vmatprep.subr.mxu0 0.0
    %182 = vmatpush1.msra.mxu0 0.0
    %183 = vmatprep.mubr.f32.mxu0 0.0
    %184 = vmatmul.mubr.f32.gmra.mrb[0].mxu0 %v117
    %v185 = vpop.f32.mrb[0].mxu0
    %v186 = vadd.f32 %v113, %v185
    %v187 = vpop.f32.mrb[0].mxu0
    %188 = vdwg.mxu0
    %v189 = vand.u32 2147483647, %v186
    %v190 = vsub.f32 0.0, %v189
    %v191 = vmul.f32 %v190, 1.442695
    %v192 = vpow.pop %v191
    %v193 = vadd.f32 %v192, 1.0
    %v194 = vrcp.pop %v193
    %vm195 = vcmp.ge.f32.partialorder %v186, 0.0
    %v196 = vmul.f32 %v192, %v194
    %v197 = vsel %vm195, %v194, %v196
    %198 = vst [vmem:[#allocation2] sm:$0x7] %v197
    // Predicated region
    $region22: #{tpu_custom_call.1} parent=1 // pred_check
      _
    $region23: #{tpu_custom_call.1} parent=1 // pred_check_branch
      %200 = sbr.rel (0) target = $region25
    $region24: #{tpu_custom_call.1} parent=1 // pred_region
      %s202 = ssub.s32 64, 64
      %203 = vsyncadd [#allocation3], %s202
      %s205 = sshll.u32 [#allocation2], 4
      %s206 = int_to_ptr.vmem [resolvable:$true] %s205
      %208 = dma.vmem_to_hbm [thread:$0]  %s206, 64, %s5, [#allocation3]
    $region25: #{tpu_custom_call.1} parent=1 // pred_fallthru
      _
    // Predicated region
    $region26: #{tpu_custom_call.1} parent=1 // pred_check
      _
    $region27: #{tpu_custom_call.1} parent=1 // pred_check_branch
      %210 = sbr.rel (0) target = $region29
    $region28: #{tpu_custom_call.1} parent=1 // pred_region
      %211 = dma.done [#allocation3], 64
    $region29: #{tpu_custom_call.1} parent=1 // pred_fallthru
      _
    %212 = vsyncpa [#allocation3], 1

</llo_original>
